<compile_context>
chip_gen: v5e
topology: v5e:2x2
jax: 0.10.0
libtpu: 0.0.40
codegen_flags: <defaults>
</compile_context>

<pallas_src>
import jax
import jax.numpy as jnp
from jax.experimental import pallas as pl
from jax.experimental.pallas import tpu as pltpu

inputDim = 2
outputDim = 1

_LANE = 128
# Rows of the [rows, 256] x-view per grid step.  1 row = 128 batch elements.
# 2048 rows => x block 2 MiB + out block 1 MiB, double-buffered ~6 MiB: fits the
# scoped-VMEM default on v5e (16 MiB) as well as v6e/v7x (32 MiB).
_DEFAULT_TILE_ROWS = 2048


def linear_sigmoid_kernel(x_ref, w_ref, b_ref, o_ref):
    """x_ref: VMEM (tbr, 256)  -- 128 batch elems/row, features interleaved on lanes
    w_ref: VMEM (256, 128)     -- expanded weights, resident (constant index_map)
    b_ref: SMEM (1,)           -- bias scalar
    o_ref: VMEM (tbr, 128)     -- sigmoid(x @ w + b), batch-dense
    """
    # MXU matmul applies the linear layer AND de-interleaves the two features:
    # y[q, m] = x[128q+m, 0]*w0 + x[128q+m, 1]*w1   (other 254 lanes hit exact zeros).
    y = jnp.dot(x_ref[...], w_ref[...],
                preferred_element_type=jnp.float32,
                precision=jax.lax.Precision.HIGHEST)
    y = y + b_ref[0]
    # sigmoid(y) = 1 / (1 + exp(-y)): exp -> EUP, approx reciprocal -> EUP,
    # one Newton step (3 VALU ops) restores ~f32 accuracy.
    d = 1.0 + jnp.exp(-y)
    r = pl.reciprocal(d, approx=True)
    r = r * (2.0 - d * r)
    o_ref[...] = r.astype(o_ref.dtype)


def linear_regression_forward(x, w, b, *, tile_rows=_DEFAULT_TILE_ROWS):
    """x: [B, inputDim] f32, w: [inputDim, outputDim=1] f32, b: [1, 1] f32.
    Returns sigmoid(x @ w + b) with shape [B, 1]."""
    B, in_dim = x.shape
    assert in_dim == inputDim and w.shape == (inputDim, outputDim) and outputDim == 1
    assert tile_rows >= 8 and tile_rows % 8 == 0, "tile_rows must be a multiple of 8"

    # Free row-major view: x[B,2] -> flat [2B] -> [rows, 256].  Row q holds batch
    # elements [128q, 128q+128) with (feat0, feat1) adjacent along the lane axis.
    x_flat = jnp.reshape(x, (-1,))
    rem = x_flat.shape[0] % (2 * _LANE)
    if rem:
        # Only non-128-multiple batches pay this extra copy (zero padding -> the
        # padded rows compute sigmoid(b) and are sliced off below).
        x_flat = jnp.pad(x_flat, (0, 2 * _LANE - rem))
    rows = x_flat.shape[0] // (2 * _LANE)
    x2 = jnp.reshape(x_flat, (rows, 2 * _LANE))

    tbr = rows if rows <= tile_rows else tile_rows
    grid = pl.cdiv(rows, tbr)  # partial last block is clipped by Pallas on writeback

    # Expanded weight: W2[2m + c, m] = w[c, 0]  (tiny: 128 KiB, built once per call,
    # DMA'd into VMEM once thanks to the constant index_map).
    eye = jnp.eye(_LANE, dtype=jnp.float32)
    w2 = jnp.reshape(jnp.stack([eye * w[0, 0], eye * w[1, 0]], axis=1),
                     (2 * _LANE, _LANE))
    b_s = jnp.reshape(b, (1,)).astype(jnp.float32)

    out2d = pl.pallas_call(
        linear_sigmoid_kernel,
        out_shape=jax.ShapeDtypeStruct((rows, _LANE), jnp.float32),
        grid=(grid,),
        in_specs=[
            pl.BlockSpec((tbr, 2 * _LANE), lambda i: (i, 0)),   # x tile, fully dense
            pl.BlockSpec((2 * _LANE, _LANE), lambda i: (0, 0)),  # expanded weights
            pl.BlockSpec(memory_space=pltpu.MemorySpace.SMEM),   # bias scalar
        ],
        out_specs=pl.BlockSpec((tbr, _LANE), lambda i: (i, 0)),  # lane-dense output
        compiler_params=pltpu.CompilerParams(
            dimension_semantics=("parallel",)),                  # megacore on v7x
        cost_estimate=pl.CostEstimate(flops=4 * B,
                                      transcendentals=B,
                                      bytes_accessed=12 * B),
    )(x2, w2, b_s)

    # Free reshapes (and a tail slice only in the padded case) back to [B, 1].
    return jnp.reshape(jnp.reshape(out2d, (-1,))[:B], (B, outputDim))


def reference_forward(x, w, b):
    return jax.nn.sigmoid(x @ w + b)


if __name__ == "__main__":
    key = jax.random.PRNGKey(0)
    kx, kw, kb, kx2, kx3 = jax.random.split(key, 5)

    # PyTorch-style uniform init bound = 1/sqrt(inputDim).
    bound = 1.0 / jnp.sqrt(jnp.float32(inputDim))
    w = jax.random.uniform(kw, (inputDim, outputDim), dtype=jnp.float32,
                           minval=-bound, maxval=bound)
    b = jax.random.uniform(kb, (1, outputDim), dtype=jnp.float32,
                           minval=-bound, maxval=bound)

    # Small, module-consistent input: batch=8, inputDim=2.
    batch = 8
    x = jax.random.normal(kx, (batch, inputDim), dtype=jnp.float32)
    out = jax.block_until_ready(linear_regression_forward(x, w, b))
    ref = reference_forward(x, w, b)
    assert out.shape == (batch, outputDim)
    assert jnp.allclose(out, ref, atol=1e-5, rtol=1e-5)

    # Aligned (zero-copy) path with a multi-step grid and a partial last block.
    batch2 = 3072
    x2 = jax.random.normal(kx2, (batch2, inputDim), dtype=jnp.float32)
    out2 = jax.block_until_ready(linear_regression_forward(x2, w, b, tile_rows=16))
    ref2 = reference_forward(x2, w, b)
    assert out2.shape == (batch2, outputDim)
    assert jnp.allclose(out2, ref2, atol=1e-5, rtol=1e-5)

    # Non-128-multiple batch (pad path).
    batch3 = 1000
    x3 = jax.random.normal(kx3, (batch3, inputDim), dtype=jnp.float32)
    out3 = jax.block_until_ready(linear_regression_forward(x3, w, b))
    ref3 = reference_forward(x3, w, b)
    assert out3.shape == (batch3, outputDim)
    assert jnp.allclose(out3, ref3, atol=1e-5, rtol=1e-5)

    print("KERNEL_OK")
</pallas_src>

<mosaic_0001>
module attributes {stable_mosaic.version = 11 : i64} {
  func.func @linear_sigmoid_kernel(%arg0: i32, %arg1: memref<1x256xf32, #tpu.memory_space<vmem>>, %arg2: memref<256x128xf32, #tpu.memory_space<vmem>>, %arg3: memref<1xf32, #tpu.memory_space<smem>>, %arg4: memref<1x128xf32, #tpu.memory_space<vmem>>) attributes {dimension_semantics = [#tpu.dimension_semantics<parallel>], iteration_bounds = array<i64: 1>, scalar_prefetch = 0 : i64, scratch_operands = 0 : i64, tpu.core_type = #tpu.core_type<tc>, window_params = [{transform_indices = @transform_0, window_bounds = array<i64: 1, 256>}, {pipeline_mode = #tpu.pipeline_mode<synchronous>, transform_indices = @transform_1, window_bounds = array<i64: 256, 128>}, {transform_indices = @transform_2, window_bounds = array<i64: 1>}, {transform_indices = @transform_3, window_bounds = array<i64: 1, 128>}]} {
    %c0 = arith.constant 0 : index
    %c0_0 = arith.constant 0 : index
    %0 = vector.load %arg1[%c0, %c0_0] : memref<1x256xf32, #tpu.memory_space<vmem>>, vector<1x256xf32>
    %c0_1 = arith.constant 0 : index
    %c0_2 = arith.constant 0 : index
    %1 = vector.load %arg2[%c0_1, %c0_2] : memref<256x128xf32, #tpu.memory_space<vmem>>, vector<256x128xf32>
    %cst = arith.constant dense<0.000000e+00> : vector<1x128xf32>
    %2 = tpu.matmul %0, %1, %cst {dimension_numbers = #tpu.dot_dimension_numbers<[1], [0], [0], [1], [0, 0, 1, 1], [], []>, precision = #tpu.contract_precision<fp32>} : vector<1x256xf32>, vector<256x128xf32>, vector<1x128xf32> -> vector<1x128xf32>
    %c0_3 = arith.constant 0 : index
    %3 = memref.load %arg3[%c0_3] : memref<1xf32, #tpu.memory_space<smem>>
    %4 = vector.broadcast %3 : f32 to vector<1x128xf32>
    %5 = arith.addf %2, %4 : vector<1x128xf32>
    %cst_4 = arith.constant 0.000000e+00 : f32
    %6 = vector.broadcast %cst_4 : f32 to vector<1x128xf32>
    %7 = arith.subf %6, %5 : vector<1x128xf32>
    %8 = math.exp %7 : vector<1x128xf32>
    %cst_5 = arith.constant 1.000000e+00 : f32
    %9 = vector.broadcast %cst_5 : f32 to vector<1x128xf32>
    %10 = arith.addf %9, %8 : vector<1x128xf32>
    %11 = tpu.reciprocal %10 {approx = true} : vector<1x128xf32> -> vector<1x128xf32>
    %12 = arith.mulf %10, %11 : vector<1x128xf32>
    %cst_6 = arith.constant 2.000000e+00 : f32
    %13 = vector.broadcast %cst_6 : f32 to vector<1x128xf32>
    %14 = arith.subf %13, %12 : vector<1x128xf32>
    %15 = arith.mulf %11, %14 : vector<1x128xf32>
    %c0_7 = arith.constant 0 : index
    %c0_8 = arith.constant 0 : index
    %16 = vector.load %arg4[%c0_7, %c0_8] : memref<1x128xf32, #tpu.memory_space<vmem>>, vector<1x128xf32>
    tpu.vector_store %arg4[%c0_7, %c0_8], %15 {strides = array<i32>} : memref<1x128xf32, #tpu.memory_space<vmem>>, vector<1x128xf32>,
    return
  }
  func.func @transform_0(%arg0: i32) -> (i32, i32) {
    %c0_i32 = arith.constant 0 : i32
    %c0_i32_0 = arith.constant 0 : i32
    return %arg0, %c0_i32 : i32, i32
  }
  func.func @transform_1(%arg0: i32) -> (i32, i32) {
    %c0_i32 = arith.constant 0 : i32
    %c0_i32_0 = arith.constant 0 : i32
    %c0_i32_1 = arith.constant 0 : i32
    return %c0_i32, %c0_i32_0 : i32, i32
  }
  func.func @transform_2(%arg0: i32) -> i32 {
    %c0_i32 = arith.constant 0 : i32
    %c0_i32_0 = arith.constant 0 : i32
    return %c0_i32 : i32
  }
  func.func @transform_3(%arg0: i32) -> (i32, i32) {
    %c0_i32 = arith.constant 0 : i32
    %c0_i32_0 = arith.constant 0 : i32
    return %arg0, %c0_i32 : i32, i32
  }
}

</mosaic_0001>

<llo_original>
// kernel: tpu_custom_call.1
$region0: #{tpu_custom_call.1}
  #allocation0 [shape = 'u32[]', space=smem, size = 0x4, offset = 0x4, fixed_abs, tag = 'smem constant byte address 0x4 - core index']
  #allocation1 [shape = 'u32[72,128]{1,0:T(1,128)}', space=vmem, size = 0x9000, scoped, tag = 'internal scratch']
  #allocation2 [shape = 'f32[1]{0:T(128)S(6)}', space=smem, size = 0x200, scoped, tag = 'scoped memory for tpu_custom_call.1']
  %s0 = inlined_call_operand.vmem [shape: f32[1,256], index: 0, kind: input, shape index: {}]
  %s1 = inlined_call_operand.hbm [shape: f32[256,128], index: 1, kind: input, shape index: {}]
  %s2 = inlined_call_operand.<no memory space> [shape: f32[1], index: 2, kind: input, shape index: {}]
  %s3 = inlined_call_operand.hbm [shape: f32[1,128], index: 3, kind: output, shape index: {}]
  %s4 = sld [smem:[#allocation0]]
  $region26: #{tpu_custom_call.1} parent=0
    _
  %s6 = ssub.s32 1, %s4
  %s7 = scalar_select 0, %s6, %s4
  %8 = sst [smem:[#allocation2]] %s2
  $region1: #{tpu_custom_call.1} parent=0
    #allocation3 [shape = 'u8[131072]{0}', space=vmem, size = 0x20000, scoped, tag = 'input window, operand 1, single buffered']
    #allocation4 [shape = 's32[1]{0}', space=sflag, size = 0x4, scoped, tag = 'scoped memory for tpu_custom_call.1']
    #allocation5 [shape = 's32[1]{0}', space=sflag, size = 0x4, scoped, tag = 'scoped memory for tpu_custom_call.1']
    #allocation6 [shape = 'u8[512]{0}', space=vmem, size = 0x400, scoped, tag = 'output window, operand 0, single buffered']
    %9 = vsyncpa [#allocation4], 0
    %10 = vsyncpa [#allocation5], 0
    // Predicated region
    $region2: #{tpu_custom_call.1} parent=1 // pred_check
      _
    $region3: #{tpu_custom_call.1} parent=1 // pred_check_branch
      %12 = sbr.rel (0) target = $region5
    $region4: #{tpu_custom_call.1} parent=1 // pred_region
      _
    $region5: #{tpu_custom_call.1} parent=1 // pred_fallthru
      _
    // Predicated region
    $region6: #{tpu_custom_call.1} parent=1 // pred_check
      _
    $region7: #{tpu_custom_call.1} parent=1 // pred_check_branch
      %14 = sbr.rel (0) target = $region9
    $region8: #{tpu_custom_call.1} parent=1 // pred_region
      %16 = vsyncadd [#allocation4], 0
      %s17 = sshll.u32 %s1, 4
      %s18 = int_to_ptr.hbm [resolvable:$true] %s17
      %s19 = sshll.u32 [#allocation3], 4
      %s20 = int_to_ptr.vmem [resolvable:$true] %s19
      %25 = dma.hbm_to_vmem [thread:$0]  %s18, 4096, %s20, [#allocation4], 128, 128, 8
    $region9: #{tpu_custom_call.1} parent=1 // pred_fallthru
      _
    // Predicated region
    $region10: #{tpu_custom_call.1} parent=1 // pred_check
      _
    $region11: #{tpu_custom_call.1} parent=1 // pred_check_branch
      %27 = sbr.rel (0) target = $region13
    $region12: #{tpu_custom_call.1} parent=1 // pred_region
      _
    $region13: #{tpu_custom_call.1} parent=1 // pred_fallthru
      _
    // Predicated region
    $region14: #{tpu_custom_call.1} parent=1 // pred_check
      _
    $region15: #{tpu_custom_call.1} parent=1 // pred_check_branch
      %29 = sbr.rel (0) target = $region17
    $region16: #{tpu_custom_call.1} parent=1 // pred_region
      %31 = dma.done [#allocation4], 4096
    $region17: #{tpu_custom_call.1} parent=1 // pred_fallthru
      _
    %v32 = vld [vmem:[%s0] sm:$0x3]
    %v33 = vld [vmem:[#allocation3] sm:$0xff]
    %v34 = vld [vmem:[#allocation3 + $0x8] sm:$0xff]
    %v35 = vld [vmem:[#allocation3 + $0x10] sm:$0xff]
    %v36 = vld [vmem:[#allocation3 + $0x18] sm:$0xff]
    %v37 = vld [vmem:[#allocation3 + $0x20] sm:$0xff]
    %v38 = vld [vmem:[#allocation3 + $0x28] sm:$0xff]
    %v39 = vld [vmem:[#allocation3 + $0x30] sm:$0xff]
    %v40 = vld [vmem:[#allocation3 + $0x38] sm:$0xff]
    %v41 = vld [vmem:[#allocation3 + $0x40] sm:$0xff]
    %v42 = vld [vmem:[#allocation3 + $0x48] sm:$0xff]
    %v43 = vld [vmem:[#allocation3 + $0x50] sm:$0xff]
    %v44 = vld [vmem:[#allocation3 + $0x58] sm:$0xff]
    %v45 = vld [vmem:[#allocation3 + $0x60] sm:$0xff]
    %v46 = vld [vmem:[#allocation3 + $0x68] sm:$0xff]
    %v47 = vld [vmem:[#allocation3 + $0x70] sm:$0xff]
    %v48 = vld [vmem:[#allocation3 + $0x78] sm:$0xff]
    %v49 = vld [vmem:[#allocation3 + $0x80] sm:$0xff]
    %v50 = vld [vmem:[#allocation3 + $0x88] sm:$0xff]
    %v51 = vld [vmem:[#allocation3 + $0x90] sm:$0xff]
    %v52 = vld [vmem:[#allocation3 + $0x98] sm:$0xff]
    %v53 = vld [vmem:[#allocation3 + $0xa0] sm:$0xff]
    %v54 = vld [vmem:[#allocation3 + $0xa8] sm:$0xff]
    %v55 = vld [vmem:[#allocation3 + $0xb0] sm:$0xff]
    %v56 = vld [vmem:[#allocation3 + $0xb8] sm:$0xff]
    %v57 = vld [vmem:[#allocation3 + $0xc0] sm:$0xff]
    %v58 = vld [vmem:[#allocation3 + $0xc8] sm:$0xff]
    %v59 = vld [vmem:[#allocation3 + $0xd0] sm:$0xff]
    %v60 = vld [vmem:[#allocation3 + $0xd8] sm:$0xff]
    %v61 = vld [vmem:[#allocation3 + $0xe0] sm:$0xff]
    %v62 = vld [vmem:[#allocation3 + $0xe8] sm:$0xff]
    %v63 = vld [vmem:[#allocation3 + $0xf0] sm:$0xff]
    %v64 = vld [vmem:[#allocation3 + $0xf8] sm:$0xff]
    %s65 = sld [smem:[#allocation2]]
    %v66 = vstv %s65
    %v68 = vperm.slane %v32, 0
    %v69 = vperm.slane %v32, 1
    %v72 = vand.u32 %v48, 4294901760
    %73 = vmatpush.msra.mxu0 %v72
    %v74 = vand.u32 %v47, 4294901760
    %75 = vmatpush.msra.mxu0 %v74
    %v76 = vand.u32 %v46, 4294901760
    %77 = vmatpush.msra.mxu0 %v76
    %v78 = vand.u32 %v45, 4294901760
    %79 = vmatpush.msra.mxu0 %v78
    %v80 = vand.u32 %v44, 4294901760
    %81 = vmatpush.msra.mxu0 %v80
    %v82 = vand.u32 %v43, 4294901760
    %83 = vmatpush.msra.mxu0 %v82
    %v84 = vand.u32 %v42, 4294901760
    %85 = vmatpush.msra.mxu0 %v84
    %v86 = vand.u32 %v41, 4294901760
    %87 = vmatpush.msra.mxu0 %v86
    %v88 = vand.u32 %v40, 4294901760
    %89 = vmatpush.msra.mxu0 %v88
    %v90 = vand.u32 %v39, 4294901760
    %91 = vmatpush.msra.mxu0 %v90
    %v92 = vand.u32 %v38, 4294901760
    %93 = vmatpush.msra.mxu0 %v92
    %v94 = vand.u32 %v37, 4294901760
    %95 = vmatpush.msra.mxu0 %v94
    %v96 = vand.u32 %v36, 4294901760
    %97 = vmatpush.msra.mxu0 %v96
    %v98 = vand.u32 %v35, 4294901760
    %99 = vmatpush.msra.mxu0 %v98
    %v100 = vand.u32 %v34, 4294901760
    %101 = vmatpush.msra.mxu0 %v100
    %v102 = vand.u32 %v33, 4294901760
    %103 = vmatpush.msra.mxu0 %v102
    %v104 = vand.u32 %v68, 4294901760
    %v105 = vsub.f32 %v68, %v104
    %v106 = vand.u32 %v105, 4294901760
    %v107 = vsub.f32 %v105, %v106
    %v108 = vand.u32 %v107, 4294901760
    %109 = vmatmul.f32.gmra.mxu0 %v108
    %v110 = vpop.f32.mrf.mxu0
    %v111 = vadd.f32 %v66, %v110
    %112 = vdwg.mxu0
    %v113 = vand.u32 %v48, 4294901760
    %v114 = vsub.f32 %v48, %v113
    %v115 = vand.u32 %v114, 4294901760
    %v116 = vsub.f32 %v114, %v115
    %v117 = vand.u32 %v116, 4294901760
    %118 = vmatpush.msra.mxu0 %v117
    %v119 = vand.u32 %v47, 4294901760
    %v120 = vsub.f32 %v47, %v119
    %v121 = vand.u32 %v120, 4294901760
    %v122 = vsub.f32 %v120, %v121
    %v123 = vand.u32 %v122, 4294901760
    %124 = vmatpush.msra.mxu0 %v123
    %v125 = vand.u32 %v46, 4294901760
    %v126 = vsub.f32 %v46, %v125
    %v127 = vand.u32 %v126, 4294901760
    %v128 = vsub.f32 %v126, %v127
    %v129 = vand.u32 %v128, 4294901760
    %130 = vmatpush.msra.mxu0 %v129
    %v131 = vand.u32 %v45, 4294901760
    %v132 = vsub.f32 %v45, %v131
    %v133 = vand.u32 %v132, 4294901760
    %v134 = vsub.f32 %v132, %v133
    %v135 = vand.u32 %v134, 4294901760
    %136 = vmatpush.msra.mxu0 %v135
    %v137 = vand.u32 %v44, 4294901760
    %v138 = vsub.f32 %v44, %v137
    %v139 = vand.u32 %v138, 4294901760
    %v140 = vsub.f32 %v138, %v139
    %v141 = vand.u32 %v140, 4294901760
    %142 = vmatpush.msra.mxu0 %v141
    %v143 = vand.u32 %v43, 4294901760
    %v144 = vsub.f32 %v43, %v143
    %v145 = vand.u32 %v144, 4294901760
    %v146 = vsub.f32 %v144, %v145
    %v147 = vand.u32 %v146, 4294901760
    %148 = vmatpush.msra.mxu0 %v147
    %v149 = vand.u32 %v42, 4294901760
    %v150 = vsub.f32 %v42, %v149
    %v151 = vand.u32 %v150, 4294901760
    %v152 = vsub.f32 %v150, %v151
    %v153 = vand.u32 %v152, 4294901760
    %154 = vmatpush.msra.mxu0 %v153
    %v155 = vand.u32 %v41, 4294901760
    %v156 = vsub.f32 %v41, %v155
    %v157 = vand.u32 %v156, 4294901760
    %v158 = vsub.f32 %v156, %v157
    %v159 = vand.u32 %v158, 4294901760
    %160 = vmatpush.msra.mxu0 %v159
    %v161 = vand.u32 %v40, 4294901760
    %v162 = vsub.f32 %v40, %v161
    %v163 = vand.u32 %v162, 4294901760
    %v164 = vsub.f32 %v162, %v163
    %v165 = vand.u32 %v164, 4294901760
    %166 = vmatpush.msra.mxu0 %v165
    %v167 = vand.u32 %v39, 4294901760
    %v168 = vsub.f32 %v39, %v167
    %v169 = vand.u32 %v168, 4294901760
    %v170 = vsub.f32 %v168, %v169
    %v171 = vand.u32 %v170, 4294901760
    %172 = vmatpush.msra.mxu0 %v171
    %v173 = vand.u32 %v38, 4294901760
    %v174 = vsub.f32 %v38, %v173
    %v175 = vand.u32 %v174, 4294901760
    %v176 = vsub.f32 %v174, %v175
    %v177 = vand.u32 %v176, 4294901760
    %178 = vmatpush.msra.mxu0 %v177
    %v179 = vand.u32 %v37, 4294901760
    %v180 = vsub.f32 %v37, %v179
    %v181 = vand.u32 %v180, 4294901760
    %v182 = vsub.f32 %v180, %v181
    %v183 = vand.u32 %v182, 4294901760
    %184 = vmatpush.msra.mxu0 %v183
    %v185 = vand.u32 %v36, 4294901760
    %v186 = vsub.f32 %v36, %v185
    %v187 = vand.u32 %v186, 4294901760
    %v188 = vsub.f32 %v186, %v187
    %v189 = vand.u32 %v188, 4294901760
    %190 = vmatpush.msra.mxu0 %v189
    %v191 = vand.u32 %v35, 4294901760
    %v192 = vsub.f32 %v35, %v191
    %v193 = vand.u32 %v192, 4294901760
    %v194 = vsub.f32 %v192, %v193
    %v195 = vand.u32 %v194, 4294901760
    %196 = vmatpush.msra.mxu0 %v195
    %v197 = vand.u32 %v34, 4294901760
    %v198 = vsub.f32 %v34, %v197
    %v199 = vand.u32 %v198, 4294901760
    %v200 = vsub.f32 %v198, %v199
    %v201 = vand.u32 %v200, 4294901760
    %202 = vmatpush.msra.mxu0 %v201
    %v203 = vand.u32 %v33, 4294901760
    %v204 = vsub.f32 %v33, %v203
    %v205 = vand.u32 %v204, 4294901760
    %v206 = vsub.f32 %v204, %v205
    %v207 = vand.u32 %v206, 4294901760
    %208 = vmatpush.msra.mxu0 %v207
    %v209 = vand.u32 %v68, 4294901760
    %210 = vmatmul.f32.gmra.mxu0 %v209
    %v211 = vpop.f32.mrf.mxu0
    %v212 = vadd.f32 %v111, %v211
    %213 = vdwg.mxu0
    %v214 = vand.u32 %v48, 4294901760
    %v215 = vsub.f32 %v48, %v214
    %216 = vmatpush.msra.mxu0 %v215
    %v217 = vand.u32 %v47, 4294901760
    %v218 = vsub.f32 %v47, %v217
    %219 = vmatpush.msra.mxu0 %v218
    %v220 = vand.u32 %v46, 4294901760
    %v221 = vsub.f32 %v46, %v220
    %222 = vmatpush.msra.mxu0 %v221
    %v223 = vand.u32 %v45, 4294901760
    %v224 = vsub.f32 %v45, %v223
    %225 = vmatpush.msra.mxu0 %v224
    %v226 = vand.u32 %v44, 4294901760
    %v227 = vsub.f32 %v44, %v226
    %228 = vmatpush.msra.mxu0 %v227
    %v229 = vand.u32 %v43, 4294901760
    %v230 = vsub.f32 %v43, %v229
    %231 = vmatpush.msra.mxu0 %v230
    %v232 = vand.u32 %v42, 4294901760
    %v233 = vsub.f32 %v42, %v232
    %234 = vmatpush.msra.mxu0 %v233
    %v235 = vand.u32 %v41, 4294901760
    %v236 = vsub.f32 %v41, %v235
    %237 = vmatpush.msra.mxu0 %v236
    %v238 = vand.u32 %v40, 4294901760
    %v239 = vsub.f32 %v40, %v238
    %240 = vmatpush.msra.mxu0 %v239
    %v241 = vand.u32 %v39, 4294901760
    %v242 = vsub.f32 %v39, %v241
    %243 = vmatpush.msra.mxu0 %v242
    %v244 = vand.u32 %v38, 4294901760
    %v245 = vsub.f32 %v38, %v244
    %246 = vmatpush.msra.mxu0 %v245
    %v247 = vand.u32 %v37, 4294901760
    %v248 = vsub.f32 %v37, %v247
    %249 = vmatpush.msra.mxu0 %v248
    %v250 = vand.u32 %v36, 4294901760
    %v251 = vsub.f32 %v36, %v250
    %252 = vmatpush.msra.mxu0 %v251
    %v253 = vand.u32 %v35, 4294901760
    %v254 = vsub.f32 %v35, %v253
    %255 = vmatpush.msra.mxu0 %v254
    %v256 = vand.u32 %v34, 4294901760
    %v257 = vsub.f32 %v34, %v256
    %258 = vmatpush.msra.mxu0 %v257
    %v259 = vand.u32 %v33, 4294901760
    %v260 = vsub.f32 %v33, %v259
    %261 = vmatpush.msra.mxu0 %v260
    %v262 = vand.u32 %v68, 4294901760
    %v263 = vsub.f32 %v68, %v262
    %264 = vmatmul.f32.gmra.mxu0 %v263
    %v265 = vpop.f32.mrf.mxu0
    %v266 = vadd.f32 %v212, %v265
    %267 = vdwg.mxu0
    %v268 = vand.u32 %v48, 4294901760
    %269 = vmatpush.msra.mxu0 %v268
    %v270 = vand.u32 %v47, 4294901760
    %271 = vmatpush.msra.mxu0 %v270
    %v272 = vand.u32 %v46, 4294901760
    %273 = vmatpush.msra.mxu0 %v272
    %v274 = vand.u32 %v45, 4294901760
    %275 = vmatpush.msra.mxu0 %v274
    %v276 = vand.u32 %v44, 4294901760
    %277 = vmatpush.msra.mxu0 %v276
    %v278 = vand.u32 %v43, 4294901760
    %279 = vmatpush.msra.mxu0 %v278
    %v280 = vand.u32 %v42, 4294901760
    %281 = vmatpush.msra.mxu0 %v280
    %v282 = vand.u32 %v41, 4294901760
    %283 = vmatpush.msra.mxu0 %v282
    %v284 = vand.u32 %v40, 4294901760
    %285 = vmatpush.msra.mxu0 %v284
    %v286 = vand.u32 %v39, 4294901760
    %287 = vmatpush.msra.mxu0 %v286
    %v288 = vand.u32 %v38, 4294901760
    %289 = vmatpush.msra.mxu0 %v288
    %v290 = vand.u32 %v37, 4294901760
    %291 = vmatpush.msra.mxu0 %v290
    %v292 = vand.u32 %v36, 4294901760
    %293 = vmatpush.msra.mxu0 %v292
    %v294 = vand.u32 %v35, 4294901760
    %295 = vmatpush.msra.mxu0 %v294
    %v296 = vand.u32 %v34, 4294901760
    %297 = vmatpush.msra.mxu0 %v296
    %v298 = vand.u32 %v33, 4294901760
    %299 = vmatpush.msra.mxu0 %v298
    %v300 = vand.u32 %v68, 4294901760
    %v301 = vsub.f32 %v68, %v300
    %v302 = vand.u32 %v301, 4294901760
    %303 = vmatmul.f32.gmra.mxu0 %v302
    %v304 = vpop.f32.mrf.mxu0
    %v305 = vadd.f32 %v266, %v304
    %306 = vdwg.mxu0
    %v307 = vand.u32 %v48, 4294901760
    %v308 = vsub.f32 %v48, %v307
    %v309 = vand.u32 %v308, 4294901760
    %310 = vmatpush.msra.mxu0 %v309
    %v311 = vand.u32 %v47, 4294901760
    %v312 = vsub.f32 %v47, %v311
    %v313 = vand.u32 %v312, 4294901760
    %314 = vmatpush.msra.mxu0 %v313
    %v315 = vand.u32 %v46, 4294901760
    %v316 = vsub.f32 %v46, %v315
    %v317 = vand.u32 %v316, 4294901760
    %318 = vmatpush.msra.mxu0 %v317
    %v319 = vand.u32 %v45, 4294901760
    %v320 = vsub.f32 %v45, %v319
    %v321 = vand.u32 %v320, 4294901760
    %322 = vmatpush.msra.mxu0 %v321
    %v323 = vand.u32 %v44, 4294901760
    %v324 = vsub.f32 %v44, %v323
    %v325 = vand.u32 %v324, 4294901760
    %326 = vmatpush.msra.mxu0 %v325
    %v327 = vand.u32 %v43, 4294901760
    %v328 = vsub.f32 %v43, %v327
    %v329 = vand.u32 %v328, 4294901760
    %330 = vmatpush.msra.mxu0 %v329
    %v331 = vand.u32 %v42, 4294901760
    %v332 = vsub.f32 %v42, %v331
    %v333 = vand.u32 %v332, 4294901760
    %334 = vmatpush.msra.mxu0 %v333
    %v335 = vand.u32 %v41, 4294901760
    %v336 = vsub.f32 %v41, %v335
    %v337 = vand.u32 %v336, 4294901760
    %338 = vmatpush.msra.mxu0 %v337
    %v339 = vand.u32 %v40, 4294901760
    %v340 = vsub.f32 %v40, %v339
    %v341 = vand.u32 %v340, 4294901760
    %342 = vmatpush.msra.mxu0 %v341
    %v343 = vand.u32 %v39, 4294901760
    %v344 = vsub.f32 %v39, %v343
    %v345 = vand.u32 %v344, 4294901760
    %346 = vmatpush.msra.mxu0 %v345
    %v347 = vand.u32 %v38, 4294901760
    %v348 = vsub.f32 %v38, %v347
    %v349 = vand.u32 %v348, 4294901760
    %350 = vmatpush.msra.mxu0 %v349
    %v351 = vand.u32 %v37, 4294901760
    %v352 = vsub.f32 %v37, %v351
    %v353 = vand.u32 %v352, 4294901760
    %354 = vmatpush.msra.mxu0 %v353
    %v355 = vand.u32 %v36, 4294901760
    %v356 = vsub.f32 %v36, %v355
    %v357 = vand.u32 %v356, 4294901760
    %358 = vmatpush.msra.mxu0 %v357
    %v359 = vand.u32 %v35, 4294901760
    %v360 = vsub.f32 %v35, %v359
    %v361 = vand.u32 %v360, 4294901760
    %362 = vmatpush.msra.mxu0 %v361
    %v363 = vand.u32 %v34, 4294901760
    %v364 = vsub.f32 %v34, %v363
    %v365 = vand.u32 %v364, 4294901760
    %366 = vmatpush.msra.mxu0 %v365
    %v367 = vand.u32 %v33, 4294901760
    %v368 = vsub.f32 %v33, %v367
    %v369 = vand.u32 %v368, 4294901760
    %370 = vmatpush.msra.mxu0 %v369
    %v371 = vand.u32 %v68, 4294901760
    %372 = vmatmul.f32.gmra.mxu0 %v371
    %v373 = vpop.f32.mrf.mxu0
    %v374 = vadd.f32 %v305, %v373
    %375 = vdwg.mxu0
    %v376 = vand.u32 %v48, 4294901760
    %377 = vmatpush.msra.mxu0 %v376
    %v378 = vand.u32 %v47, 4294901760
    %379 = vmatpush.msra.mxu0 %v378
    %v380 = vand.u32 %v46, 4294901760
    %381 = vmatpush.msra.mxu0 %v380
    %v382 = vand.u32 %v45, 4294901760
    %383 = vmatpush.msra.mxu0 %v382
    %v384 = vand.u32 %v44, 4294901760
    %385 = vmatpush.msra.mxu0 %v384
    %v386 = vand.u32 %v43, 4294901760
    %387 = vmatpush.msra.mxu0 %v386
    %v388 = vand.u32 %v42, 4294901760
    %389 = vmatpush.msra.mxu0 %v388
    %v390 = vand.u32 %v41, 4294901760
    %391 = vmatpush.msra.mxu0 %v390
    %v392 = vand.u32 %v40, 4294901760
    %393 = vmatpush.msra.mxu0 %v392
    %v394 = vand.u32 %v39, 4294901760
    %395 = vmatpush.msra.mxu0 %v394
    %v396 = vand.u32 %v38, 4294901760
    %397 = vmatpush.msra.mxu0 %v396
    %v398 = vand.u32 %v37, 4294901760
    %399 = vmatpush.msra.mxu0 %v398
    %v400 = vand.u32 %v36, 4294901760
    %401 = vmatpush.msra.mxu0 %v400
    %v402 = vand.u32 %v35, 4294901760
    %403 = vmatpush.msra.mxu0 %v402
    %v404 = vand.u32 %v34, 4294901760
    %405 = vmatpush.msra.mxu0 %v404
    %v406 = vand.u32 %v33, 4294901760
    %407 = vmatpush.msra.mxu0 %v406
    %v408 = vand.u32 %v68, 4294901760
    %409 = vmatmul.f32.gmra.mxu0 %v408
    %v410 = vpop.f32.mrf.mxu0
    %v411 = vadd.f32 %v374, %v410
    %412 = vdwg.mxu0
    %v413 = vand.u32 %v64, 4294901760
    %414 = vmatpush.msra.mxu0 %v413
    %v415 = vand.u32 %v63, 4294901760
    %416 = vmatpush.msra.mxu0 %v415
    %v417 = vand.u32 %v62, 4294901760
    %418 = vmatpush.msra.mxu0 %v417
    %v419 = vand.u32 %v61, 4294901760
    %420 = vmatpush.msra.mxu0 %v419
    %v421 = vand.u32 %v60, 4294901760
    %422 = vmatpush.msra.mxu0 %v421
    %v423 = vand.u32 %v59, 4294901760
    %424 = vmatpush.msra.mxu0 %v423
    %v425 = vand.u32 %v58, 4294901760
    %426 = vmatpush.msra.mxu0 %v425
    %v427 = vand.u32 %v57, 4294901760
    %428 = vmatpush.msra.mxu0 %v427
    %v429 = vand.u32 %v56, 4294901760
    %430 = vmatpush.msra.mxu0 %v429
    %v431 = vand.u32 %v55, 4294901760
    %432 = vmatpush.msra.mxu0 %v431
    %v433 = vand.u32 %v54, 4294901760
    %434 = vmatpush.msra.mxu0 %v433
    %v435 = vand.u32 %v53, 4294901760
    %436 = vmatpush.msra.mxu0 %v435
    %v437 = vand.u32 %v52, 4294901760
    %438 = vmatpush.msra.mxu0 %v437
    %v439 = vand.u32 %v51, 4294901760
    %440 = vmatpush.msra.mxu0 %v439
    %v441 = vand.u32 %v50, 4294901760
    %442 = vmatpush.msra.mxu0 %v441
    %v443 = vand.u32 %v49, 4294901760
    %444 = vmatpush.msra.mxu0 %v443
    %v445 = vand.u32 %v69, 4294901760
    %v446 = vsub.f32 %v69, %v445
    %v447 = vand.u32 %v446, 4294901760
    %v448 = vsub.f32 %v446, %v447
    %v449 = vand.u32 %v448, 4294901760
    %450 = vmatmul.f32.gmra.mxu0 %v449
    %v451 = vpop.f32.mrf.mxu0
    %v452 = vadd.f32 %v411, %v451
    %453 = vdwg.mxu0
    %v454 = vand.u32 %v64, 4294901760
    %v455 = vsub.f32 %v64, %v454
    %v456 = vand.u32 %v455, 4294901760
    %v457 = vsub.f32 %v455, %v456
    %v458 = vand.u32 %v457, 4294901760
    %459 = vmatpush.msra.mxu0 %v458
    %v460 = vand.u32 %v63, 4294901760
    %v461 = vsub.f32 %v63, %v460
    %v462 = vand.u32 %v461, 4294901760
    %v463 = vsub.f32 %v461, %v462
    %v464 = vand.u32 %v463, 4294901760
    %465 = vmatpush.msra.mxu0 %v464
    %v466 = vand.u32 %v62, 4294901760
    %v467 = vsub.f32 %v62, %v466
    %v468 = vand.u32 %v467, 4294901760
    %v469 = vsub.f32 %v467, %v468
    %v470 = vand.u32 %v469, 4294901760
    %471 = vmatpush.msra.mxu0 %v470
    %v472 = vand.u32 %v61, 4294901760
    %v473 = vsub.f32 %v61, %v472
    %v474 = vand.u32 %v473, 4294901760
    %v475 = vsub.f32 %v473, %v474
    %v476 = vand.u32 %v475, 4294901760
    %477 = vmatpush.msra.mxu0 %v476
    %v478 = vand.u32 %v60, 4294901760
    %v479 = vsub.f32 %v60, %v478
    %v480 = vand.u32 %v479, 4294901760
    %v481 = vsub.f32 %v479, %v480
    %v482 = vand.u32 %v481, 4294901760
    %483 = vmatpush.msra.mxu0 %v482
    %v484 = vand.u32 %v59, 4294901760
    %v485 = vsub.f32 %v59, %v484
    %v486 = vand.u32 %v485, 4294901760
    %v487 = vsub.f32 %v485, %v486
    %v488 = vand.u32 %v487, 4294901760
    %489 = vmatpush.msra.mxu0 %v488
    %v490 = vand.u32 %v58, 4294901760
    %v491 = vsub.f32 %v58, %v490
    %v492 = vand.u32 %v491, 4294901760
    %v493 = vsub.f32 %v491, %v492
    %v494 = vand.u32 %v493, 4294901760
    %495 = vmatpush.msra.mxu0 %v494
    %v496 = vand.u32 %v57, 4294901760
    %v497 = vsub.f32 %v57, %v496
    %v498 = vand.u32 %v497, 4294901760
    %v499 = vsub.f32 %v497, %v498
    %v500 = vand.u32 %v499, 4294901760
    %501 = vmatpush.msra.mxu0 %v500
    %v502 = vand.u32 %v56, 4294901760
    %v503 = vsub.f32 %v56, %v502
    %v504 = vand.u32 %v503, 4294901760
    %v505 = vsub.f32 %v503, %v504
    %v506 = vand.u32 %v505, 4294901760
    %507 = vmatpush.msra.mxu0 %v506
    %v508 = vand.u32 %v55, 4294901760
    %v509 = vsub.f32 %v55, %v508
    %v510 = vand.u32 %v509, 4294901760
    %v511 = vsub.f32 %v509, %v510
    %v512 = vand.u32 %v511, 4294901760
    %513 = vmatpush.msra.mxu0 %v512
    %v514 = vand.u32 %v54, 4294901760
    %v515 = vsub.f32 %v54, %v514
    %v516 = vand.u32 %v515, 4294901760
    %v517 = vsub.f32 %v515, %v516
    %v518 = vand.u32 %v517, 4294901760
    %519 = vmatpush.msra.mxu0 %v518
    %v520 = vand.u32 %v53, 4294901760
    %v521 = vsub.f32 %v53, %v520
    %v522 = vand.u32 %v521, 4294901760
    %v523 = vsub.f32 %v521, %v522
    %v524 = vand.u32 %v523, 4294901760
    %525 = vmatpush.msra.mxu0 %v524
    %v526 = vand.u32 %v52, 4294901760
    %v527 = vsub.f32 %v52, %v526
    %v528 = vand.u32 %v527, 4294901760
    %v529 = vsub.f32 %v527, %v528
    %v530 = vand.u32 %v529, 4294901760
    %531 = vmatpush.msra.mxu0 %v530
    %v532 = vand.u32 %v51, 4294901760
    %v533 = vsub.f32 %v51, %v532
    %v534 = vand.u32 %v533, 4294901760
    %v535 = vsub.f32 %v533, %v534
    %v536 = vand.u32 %v535, 4294901760
    %537 = vmatpush.msra.mxu0 %v536
    %v538 = vand.u32 %v50, 4294901760
    %v539 = vsub.f32 %v50, %v538
    %v540 = vand.u32 %v539, 4294901760
    %v541 = vsub.f32 %v539, %v540
    %v542 = vand.u32 %v541, 4294901760
    %543 = vmatpush.msra.mxu0 %v542
    %v544 = vand.u32 %v49, 4294901760
    %v545 = vsub.f32 %v49, %v544
    %v546 = vand.u32 %v545, 4294901760
    %v547 = vsub.f32 %v545, %v546
    %v548 = vand.u32 %v547, 4294901760
    %549 = vmatpush.msra.mxu0 %v548
    %v550 = vand.u32 %v69, 4294901760
    %551 = vmatmul.f32.gmra.mxu0 %v550
    %v552 = vpop.f32.mrf.mxu0
    %v553 = vadd.f32 %v452, %v552
    %554 = vdwg.mxu0
    %v555 = vand.u32 %v64, 4294901760
    %v556 = vsub.f32 %v64, %v555
    %557 = vmatpush.msra.mxu0 %v556
    %v558 = vand.u32 %v63, 4294901760
    %v559 = vsub.f32 %v63, %v558
    %560 = vmatpush.msra.mxu0 %v559
    %v561 = vand.u32 %v62, 4294901760
    %v562 = vsub.f32 %v62, %v561
    %563 = vmatpush.msra.mxu0 %v562
    %v564 = vand.u32 %v61, 4294901760
    %v565 = vsub.f32 %v61, %v564
    %566 = vmatpush.msra.mxu0 %v565
    %v567 = vand.u32 %v60, 4294901760
    %v568 = vsub.f32 %v60, %v567
    %569 = vmatpush.msra.mxu0 %v568
    %v570 = vand.u32 %v59, 4294901760
    %v571 = vsub.f32 %v59, %v570
    %572 = vmatpush.msra.mxu0 %v571
    %v573 = vand.u32 %v58, 4294901760
    %v574 = vsub.f32 %v58, %v573
    %575 = vmatpush.msra.mxu0 %v574
    %v576 = vand.u32 %v57, 4294901760
    %v577 = vsub.f32 %v57, %v576
    %578 = vmatpush.msra.mxu0 %v577
    %v579 = vand.u32 %v56, 4294901760
    %v580 = vsub.f32 %v56, %v579
    %581 = vmatpush.msra.mxu0 %v580
    %v582 = vand.u32 %v55, 4294901760
    %v583 = vsub.f32 %v55, %v582
    %584 = vmatpush.msra.mxu0 %v583
    %v585 = vand.u32 %v54, 4294901760
    %v586 = vsub.f32 %v54, %v585
    %587 = vmatpush.msra.mxu0 %v586
    %v588 = vand.u32 %v53, 4294901760
    %v589 = vsub.f32 %v53, %v588
    %590 = vmatpush.msra.mxu0 %v589
    %v591 = vand.u32 %v52, 4294901760
    %v592 = vsub.f32 %v52, %v591
    %593 = vmatpush.msra.mxu0 %v592
    %v594 = vand.u32 %v51, 4294901760
    %v595 = vsub.f32 %v51, %v594
    %596 = vmatpush.msra.mxu0 %v595
    %v597 = vand.u32 %v50, 4294901760
    %v598 = vsub.f32 %v50, %v597
    %599 = vmatpush.msra.mxu0 %v598
    %v600 = vand.u32 %v49, 4294901760
    %v601 = vsub.f32 %v49, %v600
    %602 = vmatpush.msra.mxu0 %v601
    %v603 = vand.u32 %v69, 4294901760
    %v604 = vsub.f32 %v69, %v603
    %605 = vmatmul.f32.gmra.mxu0 %v604
    %v606 = vpop.f32.mrf.mxu0
    %v607 = vadd.f32 %v553, %v606
    %608 = vdwg.mxu0
    %v609 = vand.u32 %v64, 4294901760
    %610 = vmatpush.msra.mxu0 %v609
    %v611 = vand.u32 %v63, 4294901760
    %612 = vmatpush.msra.mxu0 %v611
    %v613 = vand.u32 %v62, 4294901760
    %614 = vmatpush.msra.mxu0 %v613
    %v615 = vand.u32 %v61, 4294901760
    %616 = vmatpush.msra.mxu0 %v615
    %v617 = vand.u32 %v60, 4294901760
    %618 = vmatpush.msra.mxu0 %v617
    %v619 = vand.u32 %v59, 4294901760
    %620 = vmatpush.msra.mxu0 %v619
    %v621 = vand.u32 %v58, 4294901760
    %622 = vmatpush.msra.mxu0 %v621
    %v623 = vand.u32 %v57, 4294901760
    %624 = vmatpush.msra.mxu0 %v623
    %v625 = vand.u32 %v56, 4294901760
    %626 = vmatpush.msra.mxu0 %v625
    %v627 = vand.u32 %v55, 4294901760
    %628 = vmatpush.msra.mxu0 %v627
    %v629 = vand.u32 %v54, 4294901760
    %630 = vmatpush.msra.mxu0 %v629
    %v631 = vand.u32 %v53, 4294901760
    %632 = vmatpush.msra.mxu0 %v631
    %v633 = vand.u32 %v52, 4294901760
    %634 = vmatpush.msra.mxu0 %v633
    %v635 = vand.u32 %v51, 4294901760
    %636 = vmatpush.msra.mxu0 %v635
    %v637 = vand.u32 %v50, 4294901760
    %638 = vmatpush.msra.mxu0 %v637
    %v639 = vand.u32 %v49, 4294901760
    %640 = vmatpush.msra.mxu0 %v639
    %v641 = vand.u32 %v69, 4294901760
    %v642 = vsub.f32 %v69, %v641
    %v643 = vand.u32 %v642, 4294901760
    %644 = vmatmul.f32.gmra.mxu0 %v643
    %v645 = vpop.f32.mrf.mxu0
    %v646 = vadd.f32 %v607, %v645
    %647 = vdwg.mxu0
    %v648 = vand.u32 %v64, 4294901760
    %v649 = vsub.f32 %v64, %v648
    %v650 = vand.u32 %v649, 4294901760
    %651 = vmatpush.msra.mxu0 %v650
    %v652 = vand.u32 %v63, 4294901760
    %v653 = vsub.f32 %v63, %v652
    %v654 = vand.u32 %v653, 4294901760
    %655 = vmatpush.msra.mxu0 %v654
    %v656 = vand.u32 %v62, 4294901760
    %v657 = vsub.f32 %v62, %v656
    %v658 = vand.u32 %v657, 4294901760
    %659 = vmatpush.msra.mxu0 %v658
    %v660 = vand.u32 %v61, 4294901760
    %v661 = vsub.f32 %v61, %v660
    %v662 = vand.u32 %v661, 4294901760
    %663 = vmatpush.msra.mxu0 %v662
    %v664 = vand.u32 %v60, 4294901760
    %v665 = vsub.f32 %v60, %v664
    %v666 = vand.u32 %v665, 4294901760
    %667 = vmatpush.msra.mxu0 %v666
    %v668 = vand.u32 %v59, 4294901760
    %v669 = vsub.f32 %v59, %v668
    %v670 = vand.u32 %v669, 4294901760
    %671 = vmatpush.msra.mxu0 %v670
    %v672 = vand.u32 %v58, 4294901760
    %v673 = vsub.f32 %v58, %v672
    %v674 = vand.u32 %v673, 4294901760
    %675 = vmatpush.msra.mxu0 %v674
    %v676 = vand.u32 %v57, 4294901760
    %v677 = vsub.f32 %v57, %v676
    %v678 = vand.u32 %v677, 4294901760
    %679 = vmatpush.msra.mxu0 %v678
    %v680 = vand.u32 %v56, 4294901760
    %v681 = vsub.f32 %v56, %v680
    %v682 = vand.u32 %v681, 4294901760
    %683 = vmatpush.msra.mxu0 %v682
    %v684 = vand.u32 %v55, 4294901760
    %v685 = vsub.f32 %v55, %v684
    %v686 = vand.u32 %v685, 4294901760
    %687 = vmatpush.msra.mxu0 %v686
    %v688 = vand.u32 %v54, 4294901760
    %v689 = vsub.f32 %v54, %v688
    %v690 = vand.u32 %v689, 4294901760
    %691 = vmatpush.msra.mxu0 %v690
    %v692 = vand.u32 %v53, 4294901760
    %v693 = vsub.f32 %v53, %v692
    %v694 = vand.u32 %v693, 4294901760
    %695 = vmatpush.msra.mxu0 %v694
    %v696 = vand.u32 %v52, 4294901760
    %v697 = vsub.f32 %v52, %v696
    %v698 = vand.u32 %v697, 4294901760
    %699 = vmatpush.msra.mxu0 %v698
    %v700 = vand.u32 %v51, 4294901760
    %v701 = vsub.f32 %v51, %v700
    %v702 = vand.u32 %v701, 4294901760
    %703 = vmatpush.msra.mxu0 %v702
    %v704 = vand.u32 %v50, 4294901760
    %v705 = vsub.f32 %v50, %v704
    %v706 = vand.u32 %v705, 4294901760
    %707 = vmatpush.msra.mxu0 %v706
    %v708 = vand.u32 %v49, 4294901760
    %v709 = vsub.f32 %v49, %v708
    %v710 = vand.u32 %v709, 4294901760
    %711 = vmatpush.msra.mxu0 %v710
    %v712 = vand.u32 %v69, 4294901760
    %713 = vmatmul.f32.gmra.mxu0 %v712
    %v714 = vpop.f32.mrf.mxu0
    %v715 = vadd.f32 %v646, %v714
    %716 = vdwg.mxu0
    %v717 = vand.u32 %v64, 4294901760
    %718 = vmatpush.msra.mxu0 %v717
    %v719 = vand.u32 %v63, 4294901760
    %720 = vmatpush.msra.mxu0 %v719
    %v721 = vand.u32 %v62, 4294901760
    %722 = vmatpush.msra.mxu0 %v721
    %v723 = vand.u32 %v61, 4294901760
    %724 = vmatpush.msra.mxu0 %v723
    %v725 = vand.u32 %v60, 4294901760
    %726 = vmatpush.msra.mxu0 %v725
    %v727 = vand.u32 %v59, 4294901760
    %728 = vmatpush.msra.mxu0 %v727
    %v729 = vand.u32 %v58, 4294901760
    %730 = vmatpush.msra.mxu0 %v729
    %v731 = vand.u32 %v57, 4294901760
    %732 = vmatpush.msra.mxu0 %v731
    %v733 = vand.u32 %v56, 4294901760
    %734 = vmatpush.msra.mxu0 %v733
    %v735 = vand.u32 %v55, 4294901760
    %736 = vmatpush.msra.mxu0 %v735
    %v737 = vand.u32 %v54, 4294901760
    %738 = vmatpush.msra.mxu0 %v737
    %v739 = vand.u32 %v53, 4294901760
    %740 = vmatpush.msra.mxu0 %v739
    %v741 = vand.u32 %v52, 4294901760
    %742 = vmatpush.msra.mxu0 %v741
    %v743 = vand.u32 %v51, 4294901760
    %744 = vmatpush.msra.mxu0 %v743
    %v745 = vand.u32 %v50, 4294901760
    %746 = vmatpush.msra.mxu0 %v745
    %v747 = vand.u32 %v49, 4294901760
    %748 = vmatpush.msra.mxu0 %v747
    %v749 = vand.u32 %v69, 4294901760
    %750 = vmatmul.f32.gmra.mxu0 %v749
    %v751 = vpop.f32.mrf.mxu0
    %v752 = vadd.f32 %v715, %v751
    %753 = vdwg.mxu0
    %v754 = vsub.f32 0.0, %v752
    %v755 = vmul.f32 %v754, 1.442695
    %v756 = vpow.pop %v755
    %v757 = vadd.f32 %v756, 1.0
    %v758 = vrcp.pop %v757
    %v759 = vmul.f32 %v757, %v758
    %v760 = vsub.f32 2.0, %v759
    %v761 = vmul.f32 %v758, %v760
    %762 = vst [vmem:[#allocation6] sm:$0x1] %v761
    // Predicated region
    $region18: #{tpu_custom_call.1} parent=1 // pred_check
      _
    $region19: #{tpu_custom_call.1} parent=1 // pred_check_branch
      %764 = sbr.rel (0) target = $region21
    $region20: #{tpu_custom_call.1} parent=1 // pred_region
      %766 = vsyncadd [#allocation5], 0
      %s768 = sshll.u32 [#allocation6], 4
      %s769 = int_to_ptr.vmem [resolvable:$true] %s768
      %s770 = sshll.u32 %s3, 4
      %s771 = int_to_ptr.hbm [resolvable:$true] %s770
      %773 = dma.vmem_to_hbm [thread:$0]  %s769, 16, %s771, [#allocation5]
    $region21: #{tpu_custom_call.1} parent=1 // pred_fallthru
      _
    // Predicated region
    $region22: #{tpu_custom_call.1} parent=1 // pred_check
      _
    $region23: #{tpu_custom_call.1} parent=1 // pred_check_branch
      %775 = sbr.rel (0) target = $region25
    $region24: #{tpu_custom_call.1} parent=1 // pred_region
      %777 = dma.done [#allocation5], 16
    $region25: #{tpu_custom_call.1} parent=1 // pred_fallthru
      _
    %778 = vsyncpa [#allocation4], 1
    %779 = vsyncpa [#allocation5], 1

</llo_original>
